<compile_context>
chip_gen: v5e
topology: v5e:2x2
jax: 0.10.0
libtpu: 0.0.40
codegen_flags: <defaults>
</compile_context>

<pallas_src>
import jax
import jax.numpy as jnp
import numpy as np
from jax.experimental import pallas as pl
from jax.experimental.pallas import tpu as pltpu


HIDDEN = 64
LANE = 128          # vreg lane width: pad the output feature dim to this
SUBLANE = 8         # vreg sublane width: batch tile must be a multiple
MAX_BATCH_TILE = 512


def qnetwork_kernel(x_ref, w1_ref, b1_ref, w2_ref, b2_ref, w3_ref, b3_ref, o_ref):
    # fc1 + ReLU  (MXU matmul, f32 accumulation; bias/ReLU on the VPU in f32)
    h1 = jnp.dot(x_ref[...], w1_ref[...], preferred_element_type=jnp.float32)
    h1 = jnp.maximum(h1 + b1_ref[...], 0.0)
    # fc2 + ReLU
    h2 = jnp.dot(h1.astype(w2_ref.dtype), w2_ref[...],
                 preferred_element_type=jnp.float32)
    h2 = jnp.maximum(h2 + b2_ref[...], 0.0)
    # fc3 (no activation); output block is lane-padded to 128 columns
    o = jnp.dot(h2.astype(w3_ref.dtype), w3_ref[...],
                preferred_element_type=jnp.float32)
    o_ref[...] = (o + b3_ref[...]).astype(o_ref.dtype)


def qnetwork_forward(x, params, *, block_batch=MAX_BATCH_TILE,
                     compute_dtype=jnp.float32):
    """x: (batch, obs_dim) float32.  params: dict of w1,b1,w2,b2,w3,b3."""
    w1, b1 = params["w1"], params["b1"]
    w2, b2 = params["w2"], params["b2"]
    w3, b3 = params["w3"], params["b3"]

    batch, obs_dim = x.shape
    n_actions = w3.shape[1]
    out_dtype = x.dtype

    # ---- lane-dense output: pad fc3 out-features to a full 128-lane width ----
    n_pad = pl.cdiv(n_actions, LANE) * LANE
    w3p = jnp.zeros((w3.shape[0], n_pad), w3.dtype).at[:, :n_actions].set(w3)
    b3p = jnp.zeros((1, n_pad), b3.dtype).at[:, :n_actions].set(b3)

    # ---- batch tile: multiple of 8 sublanes, capped at block_batch ----------
    tb = min(block_batch, pl.cdiv(batch, SUBLANE) * SUBLANE)
    batch_pad = pl.cdiv(batch, tb) * tb
    if batch_pad != batch:
        x = jnp.pad(x, ((0, batch_pad - batch), (0, 0)))

    # MXU operands (optionally bf16 on v6e/v7x); biases stay f32 for VPU adds.
    xk = x.astype(compute_dtype)
    w1k = w1.astype(compute_dtype)
    w2k = w2.astype(compute_dtype)
    w3k = w3p.astype(compute_dtype)

    def resident(arr):
        # full-shape block, constant index -> DMA'd once, stays VMEM-resident
        return pl.BlockSpec(arr.shape, lambda i: (0,) * arr.ndim)

    grid = (batch_pad // tb,)
    out = pl.pallas_call(
        qnetwork_kernel,
        out_shape=jax.ShapeDtypeStruct((batch_pad, n_pad), out_dtype),
        grid=grid,
        in_specs=[
            pl.BlockSpec((tb, obs_dim), lambda i: (i, 0)),   # streamed x tiles
            resident(w1k), resident(b1),
            resident(w2k), resident(b2),
            resident(w3k), resident(b3p),
        ],
        out_specs=pl.BlockSpec((tb, n_pad), lambda i: (i, 0)),
        compiler_params=pltpu.CompilerParams(
            dimension_semantics=("parallel",),               # v7x: 2 TCs share grid
        ),
    )(xk, w1k, b1, w2k, b2, w3k, b3p)

    # drop the batch padding and the lane padding
    return out[:batch, :n_actions]


def init_params(obs_dim, n_actions, key):
    """Deterministic init matching nn.Linear's U(-1/sqrt(fan_in), 1/sqrt(fan_in))."""
    ks = jax.random.split(key, 6)

    def linear(kw, kb, fan_in, fan_out):
        bound = 1.0 / np.sqrt(fan_in)
        w = jax.random.uniform(kw, (fan_in, fan_out), jnp.float32, -bound, bound)
        b = jax.random.uniform(kb, (1, fan_out), jnp.float32, -bound, bound)
        return w, b

    w1, b1 = linear(ks[0], ks[1], obs_dim, HIDDEN)
    w2, b2 = linear(ks[2], ks[3], HIDDEN, HIDDEN)
    w3, b3 = linear(ks[4], ks[5], HIDDEN, n_actions)
    return {"w1": w1, "b1": b1, "w2": w2, "b2": b2, "w3": w3, "b3": b3}


def reference_forward(x, p):
    h1 = jnp.maximum(x @ p["w1"] + p["b1"], 0.0)
    h2 = jnp.maximum(h1 @ p["w2"] + p["b2"], 0.0)
    return h2 @ p["w3"] + p["b3"]


if __name__ == "__main__":
    key = jax.random.PRNGKey(0)
    k_params, k_x1, k_x2 = jax.random.split(key, 3)

    # Small synthetic problem: observation_space_shape=(4, 4) -> obs_dim=16,
    # action_space_dim=6, batch=8.
    obs_shape = (4, 4)
    obs_dim = int(np.prod(obs_shape))
    n_actions = 6
    batch = 8

    params = init_params(obs_dim, n_actions, k_params)
    x = jax.random.normal(k_x1, (batch,) + obs_shape, jnp.float32)
    x_flat = x.reshape(batch, obs_dim)  # glue: flatten obs, like np.prod(shape)

    out = qnetwork_forward(x_flat, params)
    out = jax.block_until_ready(out)
    ref = reference_forward(x_flat, params)
    np.testing.assert_allclose(np.asarray(out), np.asarray(ref),
                               rtol=1e-5, atol=1e-5)

    # Second check: a non-divisible larger batch to exercise the batch grid,
    # double-buffered x streaming and the pad/slice paths (grid = 2 tiles).
    batch2 = 600
    x2 = jax.random.normal(k_x2, (batch2, obs_dim), jnp.float32)
    out2 = jax.block_until_ready(qnetwork_forward(x2, params))
    ref2 = reference_forward(x2, params)
    np.testing.assert_allclose(np.asarray(out2), np.asarray(ref2),
                               rtol=1e-5, atol=1e-5)

    print("KERNEL_OK")
</pallas_src>

<mosaic_0001>
module attributes {stable_mosaic.version = 11 : i64} {
  func.func @qnetwork_kernel(%arg0: i32, %arg1: memref<8x16xf32, #tpu.memory_space<vmem>>, %arg2: memref<16x64xf32, #tpu.memory_space<vmem>>, %arg3: memref<1x64xf32, #tpu.memory_space<vmem>>, %arg4: memref<64x64xf32, #tpu.memory_space<vmem>>, %arg5: memref<1x64xf32, #tpu.memory_space<vmem>>, %arg6: memref<64x128xf32, #tpu.memory_space<vmem>>, %arg7: memref<1x128xf32, #tpu.memory_space<vmem>>, %arg8: memref<8x128xf32, #tpu.memory_space<vmem>>) attributes {dimension_semantics = [#tpu.dimension_semantics<parallel>], iteration_bounds = array<i64: 1>, scalar_prefetch = 0 : i64, scratch_operands = 0 : i64, tpu.core_type = #tpu.core_type<tc>, window_params = [{transform_indices = @transform_0, window_bounds = array<i64: 8, 16>}, {pipeline_mode = #tpu.pipeline_mode<synchronous>, transform_indices = @transform_1, window_bounds = array<i64: 16, 64>}, {pipeline_mode = #tpu.pipeline_mode<synchronous>, transform_indices = @transform_2, window_bounds = array<i64: 1, 64>}, {pipeline_mode = #tpu.pipeline_mode<synchronous>, transform_indices = @transform_3, window_bounds = array<i64: 64, 64>}, {pipeline_mode = #tpu.pipeline_mode<synchronous>, transform_indices = @transform_4, window_bounds = array<i64: 1, 64>}, {pipeline_mode = #tpu.pipeline_mode<synchronous>, transform_indices = @transform_5, window_bounds = array<i64: 64, 128>}, {pipeline_mode = #tpu.pipeline_mode<synchronous>, transform_indices = @transform_6, window_bounds = array<i64: 1, 128>}, {transform_indices = @transform_7, window_bounds = array<i64: 8, 128>}]} {
    %c0 = arith.constant 0 : index
    %c0_0 = arith.constant 0 : index
    %0 = vector.load %arg1[%c0, %c0_0] : memref<8x16xf32, #tpu.memory_space<vmem>>, vector<8x16xf32>
    %c0_1 = arith.constant 0 : index
    %c0_2 = arith.constant 0 : index
    %1 = vector.load %arg2[%c0_1, %c0_2] : memref<16x64xf32, #tpu.memory_space<vmem>>, vector<16x64xf32>
    %cst = arith.constant dense<0.000000e+00> : vector<8x64xf32>
    %2 = tpu.matmul %0, %1, %cst {dimension_numbers = #tpu.dot_dimension_numbers<[1], [0], [0], [1], [0, 0, 1, 1], [], []>} : vector<8x16xf32>, vector<16x64xf32>, vector<8x64xf32> -> vector<8x64xf32>
    %c0_3 = arith.constant 0 : index
    %c0_4 = arith.constant 0 : index
    %3 = vector.load %arg3[%c0_3, %c0_4] : memref<1x64xf32, #tpu.memory_space<vmem>>, vector<1x64xf32>
    %4 = vector.broadcast %3 : vector<1x64xf32> to vector<8x64xf32>
    %5 = arith.addf %2, %4 : vector<8x64xf32>
    %cst_5 = arith.constant 0.000000e+00 : f32
    %6 = vector.broadcast %cst_5 : f32 to vector<8x64xf32>
    %7 = arith.maximumf %5, %6 : vector<8x64xf32>
    %c0_6 = arith.constant 0 : index
    %c0_7 = arith.constant 0 : index
    %8 = vector.load %arg4[%c0_6, %c0_7] : memref<64x64xf32, #tpu.memory_space<vmem>>, vector<64x64xf32>
    %cst_8 = arith.constant dense<0.000000e+00> : vector<8x64xf32>
    %9 = tpu.matmul %7, %8, %cst_8 {dimension_numbers = #tpu.dot_dimension_numbers<[1], [0], [0], [1], [0, 0, 1, 1], [], []>} : vector<8x64xf32>, vector<64x64xf32>, vector<8x64xf32> -> vector<8x64xf32>
    %c0_9 = arith.constant 0 : index
    %c0_10 = arith.constant 0 : index
    %10 = vector.load %arg5[%c0_9, %c0_10] : memref<1x64xf32, #tpu.memory_space<vmem>>, vector<1x64xf32>
    %11 = vector.broadcast %10 : vector<1x64xf32> to vector<8x64xf32>
    %12 = arith.addf %9, %11 : vector<8x64xf32>
    %cst_11 = arith.constant 0.000000e+00 : f32
    %13 = vector.broadcast %cst_11 : f32 to vector<8x64xf32>
    %14 = arith.maximumf %12, %13 : vector<8x64xf32>
    %c0_12 = arith.constant 0 : index
    %c0_13 = arith.constant 0 : index
    %15 = vector.load %arg6[%c0_12, %c0_13] : memref<64x128xf32, #tpu.memory_space<vmem>>, vector<64x128xf32>
    %cst_14 = arith.constant dense<0.000000e+00> : vector<8x128xf32>
    %16 = tpu.matmul %14, %15, %cst_14 {dimension_numbers = #tpu.dot_dimension_numbers<[1], [0], [0], [1], [0, 0, 1, 1], [], []>} : vector<8x64xf32>, vector<64x128xf32>, vector<8x128xf32> -> vector<8x128xf32>
    %c0_15 = arith.constant 0 : index
    %c0_16 = arith.constant 0 : index
    %17 = vector.load %arg7[%c0_15, %c0_16] : memref<1x128xf32, #tpu.memory_space<vmem>>, vector<1x128xf32>
    %18 = vector.broadcast %17 : vector<1x128xf32> to vector<8x128xf32>
    %19 = arith.addf %16, %18 : vector<8x128xf32>
    %c0_17 = arith.constant 0 : index
    %c0_18 = arith.constant 0 : index
    %20 = vector.load %arg8[%c0_17, %c0_18] : memref<8x128xf32, #tpu.memory_space<vmem>>, vector<8x128xf32>
    tpu.vector_store %arg8[%c0_17, %c0_18], %19 {strides = array<i32>} : memref<8x128xf32, #tpu.memory_space<vmem>>, vector<8x128xf32>,
    return
  }
  func.func @transform_0(%arg0: i32) -> (i32, i32) {
    %c0_i32 = arith.constant 0 : i32
    %c0_i32_0 = arith.constant 0 : i32
    return %arg0, %c0_i32 : i32, i32
  }
  func.func @transform_1(%arg0: i32) -> (i32, i32) {
    %c0_i32 = arith.constant 0 : i32
    %c0_i32_0 = arith.constant 0 : i32
    %c0_i32_1 = arith.constant 0 : i32
    return %c0_i32, %c0_i32_0 : i32, i32
  }
  func.func @transform_2(%arg0: i32) -> (i32, i32) {
    %c0_i32 = arith.constant 0 : i32
    %c0_i32_0 = arith.constant 0 : i32
    %c0_i32_1 = arith.constant 0 : i32
    return %c0_i32, %c0_i32_0 : i32, i32
  }
  func.func @transform_3(%arg0: i32) -> (i32, i32) {
    %c0_i32 = arith.constant 0 : i32
    %c0_i32_0 = arith.constant 0 : i32
    %c0_i32_1 = arith.constant 0 : i32
    return %c0_i32, %c0_i32_0 : i32, i32
  }
  func.func @transform_4(%arg0: i32) -> (i32, i32) {
    %c0_i32 = arith.constant 0 : i32
    %c0_i32_0 = arith.constant 0 : i32
    %c0_i32_1 = arith.constant 0 : i32
    return %c0_i32, %c0_i32_0 : i32, i32
  }
  func.func @transform_5(%arg0: i32) -> (i32, i32) {
    %c0_i32 = arith.constant 0 : i32
    %c0_i32_0 = arith.constant 0 : i32
    %c0_i32_1 = arith.constant 0 : i32
    return %c0_i32, %c0_i32_0 : i32, i32
  }
  func.func @transform_6(%arg0: i32) -> (i32, i32) {
    %c0_i32 = arith.constant 0 : i32
    %c0_i32_0 = arith.constant 0 : i32
    %c0_i32_1 = arith.constant 0 : i32
    return %c0_i32, %c0_i32_0 : i32, i32
  }
  func.func @transform_7(%arg0: i32) -> (i32, i32) {
    %c0_i32 = arith.constant 0 : i32
    %c0_i32_0 = arith.constant 0 : i32
    return %arg0, %c0_i32 : i32, i32
  }
}

</mosaic_0001>

<llo_original>
// kernel: tpu_custom_call.1
$region0: #{tpu_custom_call.1}
  #allocation0 [shape = 'u32[]', space=smem, size = 0x4, offset = 0x4, fixed_abs, tag = 'smem constant byte address 0x4 - core index']
  #allocation1 [shape = 'u32[72,128]{1,0:T(1,128)}', space=vmem, size = 0x9000, scoped, tag = 'internal scratch']
  %s0 = inlined_call_operand.hbm [shape: f32[8,16], index: 0, kind: input, shape index: {}]
  %s1 = inlined_call_operand.hbm [shape: f32[16,64], index: 1, kind: input, shape index: {}]
  %s2 = inlined_call_operand.vmem [shape: f32[1,64], index: 2, kind: input, shape index: {}]
  %s3 = inlined_call_operand.hbm [shape: f32[64,64], index: 3, kind: input, shape index: {}]
  %s4 = inlined_call_operand.vmem [shape: f32[1,64], index: 4, kind: input, shape index: {}]
  %s5 = inlined_call_operand.hbm [shape: f32[64,128], index: 5, kind: input, shape index: {}]
  %s6 = inlined_call_operand.vmem [shape: f32[1,128], index: 6, kind: input, shape index: {}]
  %s7 = inlined_call_operand.hbm [shape: f32[8,128], index: 7, kind: output, shape index: {}]
  %s8 = sld [smem:[#allocation0]]
  $region54: #{tpu_custom_call.1} parent=0
    _
  %s10 = ssub.s32 1, %s8
  %s11 = scalar_select 0, %s10, %s8
  $region1: #{tpu_custom_call.1} parent=0
    #allocation2 [shape = 'u8[4096]{0}', space=vmem, size = 0x1000, scoped, tag = 'input window, operand 0, single buffered']
    #allocation3 [shape = 's32[1]{0}', space=sflag, size = 0x4, scoped, tag = 'scoped memory for tpu_custom_call.1']
    #allocation4 [shape = 's32[1]{0}', space=sflag, size = 0x4, scoped, tag = 'scoped memory for tpu_custom_call.1']
    #allocation5 [shape = 'u8[8192]{0}', space=vmem, size = 0x2000, scoped, tag = 'input window, operand 1, single buffered']
    #allocation6 [shape = 's32[1]{0}', space=sflag, size = 0x4, scoped, tag = 'scoped memory for tpu_custom_call.1']
    #allocation7 [shape = 'u8[32768]{0}', space=vmem, size = 0x8000, scoped, tag = 'input window, operand 3, single buffered']
    #allocation8 [shape = 'u8[32768]{0}', space=vmem, size = 0x8000, scoped, tag = 'input window, operand 5, single buffered']
    #allocation9 [shape = 's32[1]{0}', space=sflag, size = 0x4, scoped, tag = 'scoped memory for tpu_custom_call.1']
    #allocation10 [shape = 'u8[4096]{0}', space=vmem, size = 0x1000, scoped, tag = 'output window, operand 0, single buffered']
    %12 = vsyncpa [#allocation3], 0
    %13 = vsyncpa [#allocation6], 0
    %14 = vsyncpa [#allocation9], 0
    %15 = vsyncpa [#allocation4], 0
    // Predicated region
    $region2: #{tpu_custom_call.1} parent=1 // pred_check
      _
    $region3: #{tpu_custom_call.1} parent=1 // pred_check_branch
      %17 = sbr.rel (0) target = $region5
    $region4: #{tpu_custom_call.1} parent=1 // pred_region
      %19 = vsyncadd [#allocation3], 0
      %s21 = sshll.u32 %s0, 4
      %s22 = int_to_ptr.hbm [resolvable:$true] %s21
      %s23 = sshll.u32 [#allocation2], 4
      %s24 = int_to_ptr.vmem [resolvable:$true] %s23
      %26 = dma.hbm_to_vmem [thread:$0]  %s22, 128, %s24, [#allocation3]
    $region5: #{tpu_custom_call.1} parent=1 // pred_fallthru
      _
    // Predicated region
    $region6: #{tpu_custom_call.1} parent=1 // pred_check
      _
    $region7: #{tpu_custom_call.1} parent=1 // pred_check_branch
      %28 = sbr.rel (0) target = $region9
    $region8: #{tpu_custom_call.1} parent=1 // pred_region
      %30 = vsyncadd [#allocation6], 0
      %s31 = sshll.u32 %s1, 4
      %s32 = int_to_ptr.hbm [resolvable:$true] %s31
      %s33 = sshll.u32 [#allocation5], 4
      %s34 = int_to_ptr.vmem [resolvable:$true] %s33
      %39 = dma.hbm_to_vmem [thread:$0]  %s32, 256, %s34, [#allocation6], 128, 128, 8
    $region9: #{tpu_custom_call.1} parent=1 // pred_fallthru
      _
    // Predicated region
    $region10: #{tpu_custom_call.1} parent=1 // pred_check
      _
    $region11: #{tpu_custom_call.1} parent=1 // pred_check_branch
      %41 = sbr.rel (0) target = $region13
    $region12: #{tpu_custom_call.1} parent=1 // pred_region
      _
    $region13: #{tpu_custom_call.1} parent=1 // pred_fallthru
      _
    // Predicated region
    $region14: #{tpu_custom_call.1} parent=1 // pred_check
      _
    $region15: #{tpu_custom_call.1} parent=1 // pred_check_branch
      %43 = sbr.rel (0) target = $region17
    $region16: #{tpu_custom_call.1} parent=1 // pred_region
      %45 = vsyncadd [#allocation6], 0
      %s46 = sshll.u32 %s3, 4
      %s47 = int_to_ptr.hbm [resolvable:$true] %s46
      %s48 = sshll.u32 [#allocation7], 4
      %s49 = int_to_ptr.vmem [resolvable:$true] %s48
      %54 = dma.hbm_to_vmem [thread:$0]  %s47, 1024, %s49, [#allocation6], 128, 128, 8
    $region17: #{tpu_custom_call.1} parent=1 // pred_fallthru
      _
    // Predicated region
    $region18: #{tpu_custom_call.1} parent=1 // pred_check
      _
    $region19: #{tpu_custom_call.1} parent=1 // pred_check_branch
      %56 = sbr.rel (0) target = $region21
    $region20: #{tpu_custom_call.1} parent=1 // pred_region
      _
    $region21: #{tpu_custom_call.1} parent=1 // pred_fallthru
      _
    // Predicated region
    $region22: #{tpu_custom_call.1} parent=1 // pred_check
      _
    $region23: #{tpu_custom_call.1} parent=1 // pred_check_branch
      %58 = sbr.rel (0) target = $region25
    $region24: #{tpu_custom_call.1} parent=1 // pred_region
      %60 = vsyncadd [#allocation9], 0
      %s61 = sshll.u32 %s5, 4
      %s62 = int_to_ptr.hbm [resolvable:$true] %s61
      %s63 = sshll.u32 [#allocation8], 4
      %s64 = int_to_ptr.vmem [resolvable:$true] %s63
      %69 = dma.hbm_to_vmem [thread:$0]  %s62, 1024, %s64, [#allocation9], 128, 128, 8
    $region25: #{tpu_custom_call.1} parent=1 // pred_fallthru
      _
    // Predicated region
    $region26: #{tpu_custom_call.1} parent=1 // pred_check
      _
    $region27: #{tpu_custom_call.1} parent=1 // pred_check_branch
      %71 = sbr.rel (0) target = $region29
    $region28: #{tpu_custom_call.1} parent=1 // pred_region
      _
    $region29: #{tpu_custom_call.1} parent=1 // pred_fallthru
      _
    // Predicated region
    $region30: #{tpu_custom_call.1} parent=1 // pred_check
      _
    $region31: #{tpu_custom_call.1} parent=1 // pred_check_branch
      %73 = sbr.rel (0) target = $region33
    $region32: #{tpu_custom_call.1} parent=1 // pred_region
      %75 = dma.done [#allocation3], 128
    $region33: #{tpu_custom_call.1} parent=1 // pred_fallthru
      _
    // Predicated region
    $region34: #{tpu_custom_call.1} parent=1 // pred_check
      _
    $region35: #{tpu_custom_call.1} parent=1 // pred_check_branch
      %77 = sbr.rel (0) target = $region37
    $region36: #{tpu_custom_call.1} parent=1 // pred_region
      %79 = dma.done [#allocation6], 256
    $region37: #{tpu_custom_call.1} parent=1 // pred_fallthru
      _
    // Predicated region
    $region38: #{tpu_custom_call.1} parent=1 // pred_check
      _
    $region39: #{tpu_custom_call.1} parent=1 // pred_check_branch
      %81 = sbr.rel (0) target = $region41
    $region40: #{tpu_custom_call.1} parent=1 // pred_region
      %83 = dma.done [#allocation6], 1024
    $region41: #{tpu_custom_call.1} parent=1 // pred_fallthru
      _
    // Predicated region
    $region42: #{tpu_custom_call.1} parent=1 // pred_check
      _
    $region43: #{tpu_custom_call.1} parent=1 // pred_check_branch
      %85 = sbr.rel (0) target = $region45
    $region44: #{tpu_custom_call.1} parent=1 // pred_region
      %87 = dma.done [#allocation9], 1024
    $region45: #{tpu_custom_call.1} parent=1 // pred_fallthru
      _
    %v88 = vld [vmem:[#allocation2] sm:$0xff]
    %v89 = vld [vmem:[#allocation5] sm:$0xff]
    %v90 = vld [vmem:[#allocation5 + $0x8] sm:$0xff]
    %v91 = vld [vmem:[%s2] sm:$0x1]
    %v93 = vperm.slane %v91, 0
    %vm95 = vcmask 130048
    %v97 = vsel %vm95, %v88, 0
    %99 = vmatpush.msra.mxu0 0.0
    %100 = vmatpush.msra.mxu0 0.0
    %101 = vmatpush.msra.mxu0 0.0
    %102 = vmatpush.msra.mxu0 0.0
    %103 = vmatpush.msra.mxu0 0.0
    %104 = vmatpush.msra.mxu0 0.0
    %105 = vmatpush.msra.mxu0 0.0
    %106 = vmatpush.msra.mxu0 0.0
    %107 = vmatpush.msra.mxu0 0.0
    %108 = vmatpush.msra.mxu0 0.0
    %109 = vmatpush.msra.mxu0 0.0
    %110 = vmatpush.msra.mxu0 0.0
    %111 = vmatpush.msra.mxu0 0.0
    %112 = vmatpush.msra.mxu0 0.0
    %113 = vmatpush.msra.mxu0 %v90
    %114 = vmatpush.msra.mxu0 %v89
    %115 = vmatmul.f32.gmra.mxu0 %v97
    %v116 = vpop.f32.mrf.mxu0
    %v117 = vadd.f32 %v93, %v116
    %118 = vdwg.mxu0
    %v119 = vmax.f32 %v117, 0.0
    %v120 = vld [vmem:[#allocation7] sm:$0xff]
    %v121 = vld [vmem:[#allocation7 + $0x8] sm:$0xff]
    %v122 = vld [vmem:[#allocation7 + $0x10] sm:$0xff]
    %v123 = vld [vmem:[#allocation7 + $0x18] sm:$0xff]
    %v124 = vld [vmem:[#allocation7 + $0x20] sm:$0xff]
    %v125 = vld [vmem:[#allocation7 + $0x28] sm:$0xff]
    %v126 = vld [vmem:[#allocation7 + $0x30] sm:$0xff]
    %v127 = vld [vmem:[#allocation7 + $0x38] sm:$0xff]
    %v128 = vld [vmem:[%s4] sm:$0x1]
    %v130 = vperm.slane %v128, 0
    %vm132 = vcmask 523264
    %v134 = vsel %vm132, %v119, 0
    %136 = vmatpush.msra.mxu0 0.0
    %137 = vmatpush.msra.mxu0 0.0
    %138 = vmatpush.msra.mxu0 0.0
    %139 = vmatpush.msra.mxu0 0.0
    %140 = vmatpush.msra.mxu0 0.0
    %141 = vmatpush.msra.mxu0 0.0
    %142 = vmatpush.msra.mxu0 0.0
    %143 = vmatpush.msra.mxu0 0.0
    %144 = vmatpush.msra.mxu0 %v127
    %145 = vmatpush.msra.mxu0 %v126
    %146 = vmatpush.msra.mxu0 %v125
    %147 = vmatpush.msra.mxu0 %v124
    %148 = vmatpush.msra.mxu0 %v123
    %149 = vmatpush.msra.mxu0 %v122
    %150 = vmatpush.msra.mxu0 %v121
    %151 = vmatpush.msra.mxu0 %v120
    %152 = vmatmul.f32.gmra.mxu0 %v134
    %v153 = vpop.f32.mrf.mxu0
    %v154 = vadd.f32 %v130, %v153
    %155 = vdwg.mxu0
    %v156 = vmax.f32 %v154, 0.0
    %v157 = vld [vmem:[#allocation8] sm:$0xff]
    %v158 = vld [vmem:[#allocation8 + $0x8] sm:$0xff]
    %v159 = vld [vmem:[#allocation8 + $0x10] sm:$0xff]
    %v160 = vld [vmem:[#allocation8 + $0x18] sm:$0xff]
    %v161 = vld [vmem:[#allocation8 + $0x20] sm:$0xff]
    %v162 = vld [vmem:[#allocation8 + $0x28] sm:$0xff]
    %v163 = vld [vmem:[#allocation8 + $0x30] sm:$0xff]
    %v164 = vld [vmem:[#allocation8 + $0x38] sm:$0xff]
    %v165 = vld [vmem:[%s6] sm:$0x1]
    %v167 = vperm.slane %v165, 0
    %v170 = vsel %vm132, %v156, 0
    %172 = vmatpush.msra.mxu0 0.0
    %173 = vmatpush.msra.mxu0 0.0
    %174 = vmatpush.msra.mxu0 0.0
    %175 = vmatpush.msra.mxu0 0.0
    %176 = vmatpush.msra.mxu0 0.0
    %177 = vmatpush.msra.mxu0 0.0
    %178 = vmatpush.msra.mxu0 0.0
    %179 = vmatpush.msra.mxu0 0.0
    %180 = vmatpush.msra.mxu0 %v164
    %181 = vmatpush.msra.mxu0 %v163
    %182 = vmatpush.msra.mxu0 %v162
    %183 = vmatpush.msra.mxu0 %v161
    %184 = vmatpush.msra.mxu0 %v160
    %185 = vmatpush.msra.mxu0 %v159
    %186 = vmatpush.msra.mxu0 %v158
    %187 = vmatpush.msra.mxu0 %v157
    %188 = vmatmul.f32.gmra.mxu0 %v170
    %v189 = vpop.f32.mrf.mxu0
    %v190 = vadd.f32 %v167, %v189
    %191 = vdwg.mxu0
    %192 = vst [vmem:[#allocation10] sm:$0xff] %v190
    // Predicated region
    $region46: #{tpu_custom_call.1} parent=1 // pred_check
      _
    $region47: #{tpu_custom_call.1} parent=1 // pred_check_branch
      %194 = sbr.rel (0) target = $region49
    $region48: #{tpu_custom_call.1} parent=1 // pred_region
      %196 = vsyncadd [#allocation4], 0
      %s198 = sshll.u32 [#allocation10], 4
      %s199 = int_to_ptr.vmem [resolvable:$true] %s198
      %s200 = sshll.u32 %s7, 4
      %s201 = int_to_ptr.hbm [resolvable:$true] %s200
      %203 = dma.vmem_to_hbm [thread:$0]  %s199, 128, %s201, [#allocation4]
    $region49: #{tpu_custom_call.1} parent=1 // pred_fallthru
      _
    // Predicated region
    $region50: #{tpu_custom_call.1} parent=1 // pred_check
      _
    $region51: #{tpu_custom_call.1} parent=1 // pred_check_branch
      %205 = sbr.rel (0) target = $region53
    $region52: #{tpu_custom_call.1} parent=1 // pred_region
      %207 = dma.done [#allocation4], 128
    $region53: #{tpu_custom_call.1} parent=1 // pred_fallthru
      _
    %208 = vsyncpa [#allocation3], 1
    %209 = vsyncpa [#allocation6], 1
    %210 = vsyncpa [#allocation9], 1
    %211 = vsyncpa [#allocation4], 1

</llo_original>
